<compile_context>
chip_gen: v7x
topology: tpu7x:2x2x1
jax: 0.10.0
libtpu: 0.0.40
codegen_flags: <defaults>
</compile_context>

<pallas_src>
import functools

import jax
import jax.numpy as jnp
from jax.experimental import pallas as pl
from jax.experimental.pallas import tpu as pltpu

ALPHA = 0.25
GAMMA = 2.0
LANE = 128      # TPU lane width
SUBLANE = 8     # f32 sublane tile


def _round_up(a, b):
    return -(-a // b) * b


def _num_tensorcores():
    """2 grid shards on megacore parts (v4 / v5p / v7x); 1 on v5e / v6e."""
    try:
        kind = jax.devices()[0].device_kind.lower()
    except Exception:
        return 1
    if "v7" in kind or "v4" in kind or "v5p" in kind:
        return 2
    return 1


def _row_align(*dtypes):
    """Native second-minor tile: 8 rows (f32), 16 (bf16), 32 (int8/fp8)."""
    min_item = min(jnp.dtype(d).itemsize for d in dtypes)
    return max(SUBLANE, 32 // max(min_item, 1))


def _choose_tiling(m_rows, ncores, tile_rows, chunk_rows, align):
    """Pick (tm, chunk, nblocks, inner) so every block START lies inside the
    array (only the last block may extend past it)."""
    rows_per_core = pl.cdiv(m_rows, ncores)
    if m_rows <= align:
        # Single full-extent block: always a legal block shape.
        tm = chunk = m_rows
    else:
        max_tm = (m_rows // align) * align       # keeps block starts in-bounds
        chunk = min(chunk_rows, tile_rows, (rows_per_core // align) * align, max_tm)
        chunk = max(align, (chunk // align) * align)
        tm = min(_round_up(rows_per_core, chunk), _round_up(tile_rows, chunk), max_tm)
        tm = max(chunk, (tm // chunk) * chunk)   # multiple of chunk
    nblocks = pl.cdiv(m_rows, tm)
    inner = pl.cdiv(nblocks, ncores)
    return tm, chunk, nblocks, inner


def _focal_loss_kernel(x_ref, t_ref, o_ref, *, gamma, hard_targets, inner, tm,
                       chunk, m_rows):
    c = pl.program_id(0)
    i = pl.program_id(1)

    @pl.when(i == 0)
    def _():
        o_ref[...] = jnp.zeros_like(o_ref)

    # Nominal (un-clamped) first row of this grid step.  Steps whose nominal
    # window lies entirely past the array (only possible when nblocks is not a
    # multiple of ncores) are fully masked below and contribute exactly zero,
    # even though the index_map clamps them onto the last real block.
    base_row = (c * inner + i) * tm

    nchunks = tm // chunk

    def chunk_body(k, carry):
        row0 = k * chunk
        p = x_ref[pl.ds(row0, chunk), :].astype(jnp.float32)
        t = t_ref[pl.ds(row0, chunk), :].astype(jnp.float32)

        # Row-validity mask: handles the partial last block and redundant
        # clamped steps.  Applied to p/t BEFORE the logs so OOB garbage can
        # never become NaN/Inf (masked lanes -> p=1, t=1 -> focal = 0).
        rows = jax.lax.broadcasted_iota(jnp.int32, (chunk, LANE), 0)
        valid = (base_row + row0 + rows) < m_rows
        p = jnp.where(valid, p, 1.0)
        t = jnp.where(valid, t, 1.0)

        if hard_targets:
            # Exact for {0,1} targets: p_t = p^t (1-p)^(1-t); 1 log, no exp.
            p_t = jnp.where(t > 0.5, p, 1.0 - p)
            bce = -jnp.maximum(jnp.log(p_t), -100.0)   # PyTorch BCE log clamp
            pt = p_t
        else:
            # General (soft-label) PyTorch F.binary_cross_entropy semantics.
            log_p = jnp.maximum(jnp.log(p), -100.0)
            log_1mp = jnp.maximum(jnp.log(1.0 - p), -100.0)
            bce = -(t * log_p + (1.0 - t) * log_1mp)
            pt = jnp.exp(-bce)

        one_m_pt = 1.0 - pt
        if gamma == 2.0:
            mod = one_m_pt * one_m_pt                  # VPU square, no EUP pow
        elif gamma == 1.0:
            mod = one_m_pt
        elif gamma == 0.0:
            mod = jnp.ones_like(one_m_pt)
        else:
            mod = one_m_pt ** gamma
        focal = mod * bce                              # alpha & 1/N in wrapper

        # (chunk, 128) -> (8, 128): pure VPU adds, no cross-lane XLU reduce.
        full = chunk // SUBLANE
        tail = chunk % SUBLANE
        if full:
            o_ref[...] += focal[: full * SUBLANE].reshape(full, SUBLANE, LANE).sum(axis=0)
        if tail:
            o_ref[0:tail, :] += focal[full * SUBLANE:, :]
        return carry

    jax.lax.fori_loop(0, nchunks, chunk_body, 0, unroll=True)


def focal_loss(inputs, targets, alpha=ALPHA, gamma=GAMMA, reduction="mean", *,
               hard_targets=False, tile_rows=8192, chunk_rows=1024):
    """Focal loss matching the PyTorch module (reduction 'mean' or 'sum').

    `hard_targets=True` enables the 1-transcendental fast path (exact only for
    {0,1} labels).  bf16 inputs/targets are accepted directly; casting happens
    in-kernel so no extra HBM pass is added.
    """
    assert inputs.shape == targets.shape
    n_elems = int(inputs.size)

    x = inputs.reshape(-1)
    t = targets.reshape(-1)

    # Lane alignment.  reshape(-1, 128) of a contiguous array is free; only if
    # numel % 128 != 0 do we pad (<128 elements of p=1, t=1 -> zero loss).
    rem = n_elems % LANE
    if rem:
        # TODO(synk): this tiny pad still materializes one copy of x/t in XLA;
        # a manual-DMA (pl.ANY) path would avoid it for non-128-multiple sizes.
        pad = LANE - rem
        x = jnp.concatenate([x, jnp.ones((pad,), dtype=x.dtype)])
        t = jnp.concatenate([t, jnp.ones((pad,), dtype=t.dtype)])
    m_rows = int(x.size) // LANE
    x2 = x.reshape(m_rows, LANE)
    t2 = t.reshape(m_rows, LANE)

    ncores = _num_tensorcores()
    align = _row_align(x2.dtype, t2.dtype)
    tm, chunk, nblocks, inner = _choose_tiling(m_rows, ncores, tile_rows,
                                               chunk_rows, align)

    kernel = functools.partial(
        _focal_loss_kernel, gamma=float(gamma), hard_targets=bool(hard_targets),
        inner=inner, tm=tm, chunk=chunk, m_rows=m_rows)

    # Clamp the block index so every DMA start stays inside the array; fully
    # redundant (clamped) steps are zeroed by the in-kernel row mask.
    in_map = lambda c, i: (jnp.minimum(c * inner + i, nblocks - 1), 0)

    block_bytes = tm * LANE * (x2.dtype.itemsize + t2.dtype.itemsize)
    vmem_limit = int(min(max(2 * block_bytes + (4 << 20), 32 << 20), 64 << 20))

    partials = pl.pallas_call(
        kernel,
        out_shape=jax.ShapeDtypeStruct((ncores * SUBLANE, LANE), jnp.float32),
        grid_spec=pltpu.PrefetchScalarGridSpec(
            num_scalar_prefetch=0,
            grid=(ncores, inner),
            in_specs=[
                pl.BlockSpec((tm, LANE), in_map),
                pl.BlockSpec((tm, LANE), in_map),
            ],
            # One resident (8,128) vector accumulator block per core.
            out_specs=pl.BlockSpec((SUBLANE, LANE), lambda c, i: (c, 0)),
        ),
        compiler_params=pltpu.CompilerParams(
            dimension_semantics=("parallel", "arbitrary"),
            vmem_limit_bytes=vmem_limit,
        ),
        cost_estimate=pl.CostEstimate(
            flops=12 * n_elems,
            transcendentals=(1 if hard_targets else 3) * n_elems,
            bytes_accessed=n_elems * (x2.dtype.itemsize + t2.dtype.itemsize)
                           + ncores * SUBLANE * LANE * 4,
        ),
    )(x2, t2)

    total = jnp.sum(partials, dtype=jnp.float32) * jnp.float32(alpha)
    if reduction == "mean":
        return total / jnp.float32(n_elems)
    if reduction == "sum":
        return total
    # TODO(synk): reduction='none' (per-element loss map) not implemented in the kernel.
    raise NotImplementedError("reduction must be 'mean' or 'sum'")


def focal_loss_ref(inputs, targets, alpha=ALPHA, gamma=GAMMA):
    log_p = jnp.maximum(jnp.log(inputs), -100.0)
    log_1mp = jnp.maximum(jnp.log(1.0 - inputs), -100.0)
    bce = -(targets * log_p + (1.0 - targets) * log_1mp)
    pt = jnp.exp(-bce)
    return jnp.mean(alpha * (1.0 - pt) ** gamma * bce)


if __name__ == "__main__":
    key = jax.random.PRNGKey(0)
    k1, k2 = jax.random.split(key)

    # NCHW-shaped probabilities / binary targets, as the CNN would produce.
    B, C, H, W = 2, 4, 16, 16
    logits = jax.random.normal(k1, (B, C, H, W), dtype=jnp.float32)
    inputs = jax.nn.sigmoid(logits)                                   # probs in (0,1)
    targets = (jax.random.uniform(k2, (B, C, H, W)) > 0.5).astype(jnp.float32)

    ref = focal_loss_ref(inputs, targets)

    # Default (soft-label, exact PyTorch BCE) path.
    loss = jax.block_until_ready(focal_loss(inputs, targets))
    assert jnp.allclose(loss, ref, rtol=1e-5, atol=1e-6), (loss, ref)

    # Hard-target fast path (1 transcendental/element) — exact for {0,1} labels.
    loss_hard = jax.block_until_ready(focal_loss(inputs, targets, hard_targets=True))
    assert jnp.allclose(loss_hard, ref, rtol=1e-5, atol=1e-6), (loss_hard, ref)

    # Non-128-multiple element count: exercises the tail pad + in-kernel mask.
    in_odd = jax.nn.sigmoid(jax.random.normal(k1, (3, 5, 7), dtype=jnp.float32))
    tg_odd = (jax.random.uniform(k2, (3, 5, 7)) > 0.5).astype(jnp.float32)
    loss_odd = jax.block_until_ready(focal_loss(in_odd, tg_odd))
    ref_odd = focal_loss_ref(in_odd, tg_odd)
    assert jnp.allclose(loss_odd, ref_odd, rtol=1e-5, atol=1e-6), (loss_odd, ref_odd)

    print("KERNEL_OK")
</pallas_src>

<mosaic_0001>
module attributes {stable_mosaic.version = 11 : i64} {
  func.func @_focal_loss_kernel(%arg0: i32, %arg1: i32, %arg2: memref<16x128xf32, #tpu.memory_space<vmem>>, %arg3: memref<16x128xf32, #tpu.memory_space<vmem>>, %arg4: memref<8x128xf32, #tpu.memory_space<vmem>>) attributes {dimension_semantics = [#tpu.dimension_semantics<parallel>, #tpu.dimension_semantics<arbitrary>], iteration_bounds = array<i64: 1, 1>, scalar_prefetch = 0 : i64, scratch_operands = 0 : i64, tpu.core_type = #tpu.core_type<tc>, window_params = [{transform_indices = @transform_0, window_bounds = array<i64: 16, 128>}, {transform_indices = @transform_1, window_bounds = array<i64: 16, 128>}, {transform_indices = @transform_2, window_bounds = array<i64: 8, 128>}]} {
    %c0_i32 = arith.constant 0 : i32
    %0 = arith.cmpi eq, %arg1, %c0_i32 : i32
    %1 = arith.extui %0 : i1 to i32
    %c0_i32_0 = arith.constant 0 : i32
    %2 = arith.cmpi ne, %1, %c0_i32_0 : i32
    scf.if %2 {
      %cst_19 = arith.constant 0.000000e+00 : f32
      %48 = vector.broadcast %cst_19 : f32 to vector<8x128xf32>
      %c0_20 = arith.constant 0 : index
      %c0_21 = arith.constant 0 : index
      %49 = vector.load %arg4[%c0_20, %c0_21] : memref<8x128xf32, #tpu.memory_space<vmem>>, vector<8x128xf32>
      tpu.vector_store %arg4[%c0_20, %c0_21], %48 {strides = array<i32>} : memref<8x128xf32, #tpu.memory_space<vmem>>, vector<8x128xf32>,
    } else {
    }
    %c1_i32 = arith.constant 1 : i32
    %3 = arith.muli %arg0, %c1_i32 : i32
    %4 = arith.addi %3, %arg1 : i32
    %c16_i32 = arith.constant 16 : i32
    %5 = arith.muli %4, %c16_i32 : i32
    %c0_i32_1 = arith.constant 0 : i32
    %c16_i32_2 = arith.constant 16 : i32
    %6 = arith.muli %c0_i32_1, %c16_i32_2 : i32
    %7 = arith.index_cast %6 : i32 to index
    %c0 = arith.constant 0 : index
    %8 = vector.load %arg2[%7, %c0] : memref<16x128xf32, #tpu.memory_space<vmem>>, vector<16x128xf32>
    %9 = arith.index_cast %6 : i32 to index
    %c0_3 = arith.constant 0 : index
    %10 = vector.load %arg3[%9, %c0_3] : memref<16x128xf32, #tpu.memory_space<vmem>>, vector<16x128xf32>
    %11 = tpu.iota {dimensions = array<i32: 0>} : vector<16x128xi32>
    %12 = arith.addi %5, %6 : i32
    %13 = vector.broadcast %12 : i32 to vector<16x128xi32>
    %14 = arith.addi %13, %11 : vector<16x128xi32>
    %c16_i32_4 = arith.constant 16 : i32
    %15 = vector.broadcast %c16_i32_4 : i32 to vector<16x128xi32>
    %16 = arith.cmpi slt, %14, %15 : vector<16x128xi32>
    %cst = arith.constant 1.000000e+00 : f32
    %17 = vector.broadcast %cst : f32 to vector<16x128xf32>
    %18 = arith.select %16, %8, %17 : vector<16x128xi1>, vector<16x128xf32>
    %cst_5 = arith.constant 1.000000e+00 : f32
    %19 = vector.broadcast %cst_5 : f32 to vector<16x128xf32>
    %20 = arith.select %16, %10, %19 : vector<16x128xi1>, vector<16x128xf32>
    %21 = math.log %18 : vector<16x128xf32>
    %cst_6 = arith.constant -1.000000e+02 : f32
    %22 = vector.broadcast %cst_6 : f32 to vector<16x128xf32>
    %23 = arith.maximumf %21, %22 : vector<16x128xf32>
    %cst_7 = arith.constant 1.000000e+00 : f32
    %24 = vector.broadcast %cst_7 : f32 to vector<16x128xf32>
    %25 = arith.subf %24, %18 : vector<16x128xf32>
    %26 = math.log %25 : vector<16x128xf32>
    %cst_8 = arith.constant -1.000000e+02 : f32
    %27 = vector.broadcast %cst_8 : f32 to vector<16x128xf32>
    %28 = arith.maximumf %26, %27 : vector<16x128xf32>
    %29 = arith.mulf %20, %23 : vector<16x128xf32>
    %cst_9 = arith.constant 1.000000e+00 : f32
    %30 = vector.broadcast %cst_9 : f32 to vector<16x128xf32>
    %31 = arith.subf %30, %20 : vector<16x128xf32>
    %32 = arith.mulf %31, %28 : vector<16x128xf32>
    %33 = arith.addf %29, %32 : vector<16x128xf32>
    %cst_10 = arith.constant 0.000000e+00 : f32
    %34 = vector.broadcast %cst_10 : f32 to vector<16x128xf32>
    %35 = arith.subf %34, %33 : vector<16x128xf32>
    %cst_11 = arith.constant 0.000000e+00 : f32
    %36 = vector.broadcast %cst_11 : f32 to vector<16x128xf32>
    %37 = arith.subf %36, %35 : vector<16x128xf32>
    %38 = math.exp %37 : vector<16x128xf32>
    %cst_12 = arith.constant 1.000000e+00 : f32
    %39 = vector.broadcast %cst_12 : f32 to vector<16x128xf32>
    %40 = arith.subf %39, %38 : vector<16x128xf32>
    %41 = arith.mulf %40, %40 : vector<16x128xf32>
    %42 = arith.mulf %41, %35 : vector<16x128xf32>
    %c0_13 = arith.constant 0 : index
    %c0_14 = arith.constant 0 : index
    %43 = vector.load %arg4[%c0_13, %c0_14] : memref<8x128xf32, #tpu.memory_space<vmem>>, vector<8x128xf32>
    %44 = vector.shape_cast %42 : vector<16x128xf32> to vector<2x8x128xf32>
    %cst_15 = arith.constant dense<0.000000e+00> : vector<8x128xf32>
    %45 = vector.multi_reduction <add>, %44, %cst_15 [0] : vector<2x8x128xf32> to vector<8x128xf32>
    %46 = arith.addf %43, %45 : vector<8x128xf32>
    %c0_16 = arith.constant 0 : index
    %c0_17 = arith.constant 0 : index
    %47 = vector.load %arg4[%c0_16, %c0_17] : memref<8x128xf32, #tpu.memory_space<vmem>>, vector<8x128xf32>
    tpu.vector_store %arg4[%c0_16, %c0_17], %46 {strides = array<i32>} : memref<8x128xf32, #tpu.memory_space<vmem>>, vector<8x128xf32>,
    %c1_i32_18 = arith.constant 1 : i32
    return
  }
  func.func @transform_0(%arg0: i32, %arg1: i32) -> (i32, i32) {
    %c1_i32 = arith.constant 1 : i32
    %0 = arith.muli %arg0, %c1_i32 : i32
    %1 = arith.addi %0, %arg1 : i32
    %c0_i32 = arith.constant 0 : i32
    %2 = arith.minsi %1, %c0_i32 : i32
    %c0_i32_0 = arith.constant 0 : i32
    %c0_i32_1 = arith.constant 0 : i32
    return %2, %c0_i32_0 : i32, i32
  }
  func.func @transform_1(%arg0: i32, %arg1: i32) -> (i32, i32) {
    %c1_i32 = arith.constant 1 : i32
    %0 = arith.muli %arg0, %c1_i32 : i32
    %1 = arith.addi %0, %arg1 : i32
    %c0_i32 = arith.constant 0 : i32
    %2 = arith.minsi %1, %c0_i32 : i32
    %c0_i32_0 = arith.constant 0 : i32
    %c0_i32_1 = arith.constant 0 : i32
    return %2, %c0_i32_0 : i32, i32
  }
  func.func @transform_2(%arg0: i32, %arg1: i32) -> (i32, i32) {
    %c0_i32 = arith.constant 0 : i32
    %c0_i32_0 = arith.constant 0 : i32
    return %arg0, %c0_i32 : i32, i32
  }
}

</mosaic_0001>

<llo_original>
// kernel: tpu_custom_call.1
$region0: #{tpu_custom_call.1}
  #allocation0 [shape = 'u32[]', space=smem, size = 0x4, offset = 0x4, fixed_abs, tag = 'smem constant byte address 0x4 - core index']
  #allocation1 [shape = 'u32[144,128]{1,0:T(1,128)}', space=vmem, size = 0x12000, scoped, tag = 'internal scratch']
  %s0 = inlined_call_operand.hbm [shape: f32[16,128], index: 0, kind: input, shape index: {}]
  %s1 = inlined_call_operand.hbm [shape: f32[16,128], index: 1, kind: input, shape index: {}]
  %s2 = inlined_call_operand.hbm [shape: f32[8,128], index: 2, kind: output, shape index: {}]
  %s3 = sld [smem:[#allocation0]]
  $region30: #{tpu_custom_call.1} parent=0
    _
  %s5 = ssub.s32 1, %s3
  %s6 = scalar_select 0, %s5, %s3
  $region1: #{tpu_custom_call.1} parent=0
    #allocation2 [shape = 'u8[8192]{0}', space=vmem, size = 0x2000, scoped, tag = 'input window, operand 0, single buffered']
    #allocation3 [shape = 's32[1]{0}', space=sflag, size = 0x4, scoped, tag = 'scoped memory for tpu_custom_call.1']
    #allocation4 [shape = 's32[1]{0}', space=sflag, size = 0x4, scoped, tag = 'scoped memory for tpu_custom_call.1']
    #allocation5 [shape = 'u8[8192]{0}', space=vmem, size = 0x2000, scoped, tag = 'input window, operand 1, single buffered']
    #allocation6 [shape = 's32[1]{0}', space=sflag, size = 0x4, scoped, tag = 'scoped memory for tpu_custom_call.1']
    #allocation7 [shape = 'u8[4096]{0}', space=vmem, size = 0x1000, scoped, tag = 'output window, operand 0, single buffered']
    %7 = vsyncpa [#allocation3], 0
    %8 = vsyncpa [#allocation6], 0
    %9 = vsyncpa [#allocation4], 0
    // Predicated region
    $region2: #{tpu_custom_call.1} parent=1 // pred_check
      _
    $region3: #{tpu_custom_call.1} parent=1 // pred_check_branch
      %11 = sbr.rel (0) target = $region5
    $region4: #{tpu_custom_call.1} parent=1 // pred_region
      %s12 = sadd.s32 0, 0
      %p13 = scmp.lt.s32.totalorder %s12, 0
      %s14 = scalar_select %p13, %s12, 0
      %s15 = smul.u32 2, %s14
      %s17 = ssub.s32 256, 256
      %18 = vsyncadd [#allocation3], %s17
      %s19 = smul.addr %s15, 128
      %s20 = scalar_lea.hbm %s0, %s19
      %s21 = sshll.u32 [#allocation2], 4
      %s22 = int_to_ptr.vmem [resolvable:$true] %s21
      %27 = dma.hbm_to_vmem [thread:$0]  %s20, 256, %s22, [#allocation3], 128, 128, 8
    $region5: #{tpu_custom_call.1} parent=1 // pred_fallthru
      _
    // Predicated region
    $region6: #{tpu_custom_call.1} parent=1 // pred_check
      _
    $region7: #{tpu_custom_call.1} parent=1 // pred_check_branch
      %29 = sbr.rel (0) target = $region9
    $region8: #{tpu_custom_call.1} parent=1 // pred_region
      %s30 = sadd.s32 0, 0
      %p31 = scmp.lt.s32.totalorder %s30, 0
      %s32 = scalar_select %p31, %s30, 0
      %s33 = smul.u32 2, %s32
      %s35 = ssub.s32 256, 256
      %36 = vsyncadd [#allocation6], %s35
      %s37 = smul.addr %s33, 128
      %s38 = scalar_lea.hbm %s1, %s37
      %s39 = sshll.u32 [#allocation5], 4
      %s40 = int_to_ptr.vmem [resolvable:$true] %s39
      %45 = dma.hbm_to_vmem [thread:$0]  %s38, 256, %s40, [#allocation6], 128, 128, 8
    $region9: #{tpu_custom_call.1} parent=1 // pred_fallthru
      _
    // Predicated region
    $region10: #{tpu_custom_call.1} parent=1 // pred_check
      _
    $region11: #{tpu_custom_call.1} parent=1 // pred_check_branch
      %47 = sbr.rel (0) target = $region13
    $region12: #{tpu_custom_call.1} parent=1 // pred_region
      %48 = dma.done [#allocation3], 256
    $region13: #{tpu_custom_call.1} parent=1 // pred_fallthru
      _
    // Predicated region
    $region14: #{tpu_custom_call.1} parent=1 // pred_check
      _
    $region15: #{tpu_custom_call.1} parent=1 // pred_check_branch
      %50 = sbr.rel (0) target = $region17
    $region16: #{tpu_custom_call.1} parent=1 // pred_region
      %51 = dma.done [#allocation6], 256
    $region17: #{tpu_custom_call.1} parent=1 // pred_fallthru
      _
    %s52 = sadd.s32 0, 0
    %p53 = scmp.lt.s32.totalorder %s52, 0
    %s54 = scalar_select %p53, %s52, 0
    %s55 = smul.u32 2, %s54
    %s56 = sadd.s32 0, 0
    %p57 = scmp.lt.s32.totalorder %s56, 0
    %s58 = scalar_select %p57, %s56, 0
    %s59 = smul.u32 2, %s58
    %p60 = scmp.eq.s32.totalorder 0, 0
    // Predicated region
    $region18: #{tpu_custom_call.1} parent=1 // pred_check
      %p61 = pneg %p60
    $region19: #{tpu_custom_call.1} parent=1 // pred_check_branch
      %63 = sbr.rel (%p61) target = $region21
    $region20: #{tpu_custom_call.1} parent=1 // pred_region
      %64 = vst [vmem:[#allocation7] sm:$0xff] 0.0
    $region21: #{tpu_custom_call.1} parent=1 // pred_fallthru
      _
    %s65 = sadd.s32 0, 0
    %s66 = smul.u32 %s65, 16
    %v67 = vld [vmem:[#allocation2] sm:$0xff]
    %v68 = vld [vmem:[#allocation2 + $0x8] sm:$0xff]
    %v69 = vld [vmem:[#allocation5] sm:$0xff]
    %v70 = vld [vmem:[#allocation5 + $0x8] sm:$0xff]
    %v71 = vlaneseq
    %v72 = vshrl.u32 %v71, 7
    %v73 = vadd.s32 %v72, 8
    %v74 = vstv %s66
    %v75 = vadd.s32 %v74, %v72
    %v76 = vadd.s32 %v74, %v73
    %vm77 = vcmp.lt.s32.totalorder %v75, 16
    %vm78 = vcmp.lt.s32.totalorder %v76, 16
    %v79 = vsel %vm77, %v67, 1.0
    %v80 = vsel %vm78, %v68, 1.0
    %v81 = vsel %vm77, %v69, 1.0
    %v82 = vsel %vm78, %v70, 1.0
    %v83 = vlog2.pop %v79
    %v84 = vmul.f32 %v83, 0.6931472
    %v85 = vlog2.pop %v80
    %v86 = vmul.f32 %v85, 0.6931472
    %v87 = vmax.f32 %v84, -100.0
    %v88 = vmax.f32 %v86, -100.0
    %v89 = vsub.f32 1.0, %v79
    %v90 = vsub.f32 1.0, %v80
    %v91 = vlog2.pop %v89
    %v92 = vmul.f32 %v91, 0.6931472
    %v93 = vlog2.pop %v90
    %v94 = vmul.f32 %v93, 0.6931472
    %v95 = vmax.f32 %v92, -100.0
    %v96 = vmax.f32 %v94, -100.0
    %v97 = vmul.f32 %v81, %v87
    %v98 = vmul.f32 %v82, %v88
    %v99 = vsub.f32 1.0, %v81
    %v100 = vsub.f32 1.0, %v82
    %v101 = vmul.f32 %v99, %v95
    %v102 = vmul.f32 %v100, %v96
    %v103 = vadd.f32 %v97, %v101
    %v104 = vadd.f32 %v98, %v102
    %v105 = vsub.f32 0.0, %v103
    %v106 = vsub.f32 0.0, %v104
    %v107 = vsub.f32 0.0, %v105
    %v108 = vsub.f32 0.0, %v106
    %v109 = vmul.f32 %v107, 1.442695
    %v110 = vpow.pop %v109
    %v111 = vmul.f32 %v108, 1.442695
    %v112 = vpow.pop %v111
    %v113 = vsub.f32 1.0, %v110
    %v114 = vsub.f32 1.0, %v112
    %v115 = vmul.f32 %v113, %v113
    %v116 = vmul.f32 %v114, %v114
    %v117 = vmul.f32 %v115, %v105
    %v118 = vmul.f32 %v116, %v106
    %v119 = vld [vmem:[#allocation7] sm:$0xff]
    %v120 = vadd.f32 %v117, %v118
    %v121 = vadd.f32 %v119, %v120
    %122 = vst [vmem:[#allocation7] sm:$0xff] %v121
    // Predicated region
    $region22: #{tpu_custom_call.1} parent=1 // pred_check
      _
    $region23: #{tpu_custom_call.1} parent=1 // pred_check_branch
      %124 = sbr.rel (0) target = $region25
    $region24: #{tpu_custom_call.1} parent=1 // pred_region
      %s126 = ssub.s32 128, 128
      %127 = vsyncadd [#allocation4], %s126
      %s129 = sshll.u32 [#allocation7], 4
      %s130 = int_to_ptr.vmem [resolvable:$true] %s129
      %132 = dma.vmem_to_hbm [thread:$0]  %s130, 128, %s2, [#allocation4]
    $region25: #{tpu_custom_call.1} parent=1 // pred_fallthru
      _
    // Predicated region
    $region26: #{tpu_custom_call.1} parent=1 // pred_check
      _
    $region27: #{tpu_custom_call.1} parent=1 // pred_check_branch
      %134 = sbr.rel (0) target = $region29
    $region28: #{tpu_custom_call.1} parent=1 // pred_region
      %135 = dma.done [#allocation4], 128
    $region29: #{tpu_custom_call.1} parent=1 // pred_fallthru
      _
    %136 = vsyncpa [#allocation3], 1
    %137 = vsyncpa [#allocation6], 1
    %138 = vsyncpa [#allocation4], 1

</llo_original>
